<compile_context>
chip_gen: v7x
topology: tpu7x:2x2x1
jax: 0.10.0
libtpu: 0.0.40
codegen_flags: <defaults>
</compile_context>

<pallas_src>
import functools

import jax
import jax.numpy as jnp
from jax.experimental import pallas as pl
from jax.experimental.pallas import tpu as pltpu


def _conv3x3_kernel(x_ref, w_ref, b_ref, o_ref, col_ref, *,
                    b_tile, cin, kh_sz, kw_sz, width, span):
    """Fused im2col + single-GEMM valid 3x3 conv for one batch tile.

    x_ref  : (B_TILE, Cin, H*W + pad)   flattened (row-major) zero-padded images
    w_ref  : (Cout, KH*KW*Cin)          tap-major / channel-minor weights
    b_ref  : (Cout, 1)                  bias
    o_ref  : (B_TILE, Cout, H*W)        lane-dense flattened output (trim later)
    col_ref: (KH*KW*Cin, B_TILE*H*W)    VMEM im2col scratch
    """
    # 1) Materialize the im2col columns into VMEM scratch: 9*B_TILE small,
    #    statically-offset contiguous copies (no 9x patch tensor in HBM).
    for b in range(b_tile):
        for kh in range(kh_sz):
            for kw in range(kw_sz):
                tap = kh * kw_sz + kw
                col_ref[pl.ds(tap * cin, cin), pl.ds(b * span, span)] = (
                    x_ref[b, :, pl.ds(kh * width + kw, span)])

    # 2) ONE MXU GEMM: (Cout, KH*KW*Cin) x (KH*KW*Cin, B_TILE*H*W), f32 acc.
    acc = jnp.dot(w_ref[...], col_ref[...], preferred_element_type=jnp.float32)
    acc = acc + b_ref[...]                      # bias broadcast over lanes

    # 3) Lane-dense (unmasked) stores: one (Cout, H*W) slab per image.
    for b in range(b_tile):
        o_ref[b] = acc[:, b * span:(b + 1) * span]


def init_conv_params(weight, bias):
    """One-time parameter repack (hoisted out of the per-call path).

    weight: (Cout, Cin, KH, KW) OIHW -> (Cout, KH*KW*Cin) tap-major/channel-minor
    bias:   (Cout,)             -> (Cout, 1)
    """
    Cout, Cin, KH, KW = weight.shape
    w2d = jnp.transpose(weight, (0, 2, 3, 1)).reshape(Cout, KH * KW * Cin)
    b2d = bias.reshape(Cout, 1)
    return w2d, b2d


@functools.partial(jax.jit, static_argnames=("kh", "kw"))
def conv2d_pallas(x, w2d, b2d, *, kh=3, kw=3):
    """Valid KHxKW conv, stride 1, matching torch.nn.Conv2d(Cin, Cout, k).

    x:   (N, Cin, H, W) float32 (NCHW)
    w2d: (Cout, KH*KW*Cin) float32 (from init_conv_params)
    b2d: (Cout, 1) float32
    returns (N, Cout, OH, OW) float32
    """
    N, Cin, H, W = x.shape
    Cout = w2d.shape[0]
    OH, OW = H - kh + 1, W - kw + 1
    span = H * W                          # lane-dense output width per image
    pad = (kh - 1) * W + (kw - 1)         # keeps every tap slice in bounds

    # Batch tile: keep >= 2 "parallel" grid steps when possible (v7x megacore)
    # while amortizing per-step overhead on single-TC chips. N=2 -> grid=(2,).
    b_tile = N // 2 if (N >= 2 and N % 2 == 0) else 1
    n_steps = N // b_tile

    # Free contiguous reshape + tiny zero pad (fused under this jit).
    x_flat = jnp.pad(x.reshape(N, Cin, span), ((0, 0), (0, 0), (0, pad)))

    kernel = functools.partial(
        _conv3x3_kernel, b_tile=b_tile, cin=Cin, kh_sz=kh, kw_sz=kw,
        width=W, span=span)

    out = pl.pallas_call(
        kernel,
        out_shape=jax.ShapeDtypeStruct((N, Cout, span), jnp.float32),
        grid=(n_steps,),
        in_specs=[
            pl.BlockSpec((b_tile, Cin, span + pad), lambda n: (n, 0, 0)),
            pl.BlockSpec((Cout, kh * kw * Cin), lambda n: (0, 0)),
            pl.BlockSpec((Cout, 1), lambda n: (0, 0)),
        ],
        out_specs=pl.BlockSpec((b_tile, Cout, span), lambda n: (n, 0, 0)),
        scratch_shapes=[pltpu.VMEM((kh * kw * Cin, b_tile * span), jnp.float32)],
        compiler_params=pltpu.CompilerParams(
            dimension_semantics=("parallel",)),   # megacore-shard batch steps
    )(x_flat, w2d, b2d)

    # (N, Cout, H*W) -> (N, Cout, H, W); trim the garbage right/bottom edge.
    # Fused inside this jit; the kernel keeps its unmasked 256-lane stores.
    return out.reshape(N, Cout, H, W)[:, :, :OH, :OW]


if __name__ == "__main__":
    key = jax.random.PRNGKey(0)
    kx, kw_, kb = jax.random.split(key, 3)

    # Shapes consistent with Conv2d(3, 64, 3): N=2, Cin=3, H=W=16.
    x = jax.random.normal(kx, (2, 3, 16, 16), dtype=jnp.float32)

    # Deterministic init (mimics PyTorch's default uniform bound 1/sqrt(fan_in)).
    fan_in = 3 * 3 * 3
    bound = (1.0 / fan_in) ** 0.5
    weight = jax.random.uniform(kw_, (64, 3, 3, 3), minval=-bound, maxval=bound,
                                dtype=jnp.float32)
    bias = jax.random.uniform(kb, (64,), minval=-bound, maxval=bound,
                              dtype=jnp.float32)

    # One-time parameter repack (model init), hoisted out of the call path.
    w2d, b2d = init_conv_params(weight, bias)

    out = conv2d_pallas(x, w2d, b2d)
    jax.block_until_ready(out)
    assert out.shape == (2, 64, 14, 14), out.shape

    # Cross-check against XLA's conv for correctness.
    ref = jax.lax.conv_general_dilated(
        x, weight, window_strides=(1, 1), padding="VALID",
        dimension_numbers=("NCHW", "OIHW", "NCHW"),
    ) + bias[None, :, None, None]
    assert jnp.allclose(out, ref, atol=1e-4, rtol=1e-4)

    print("KERNEL_OK")
</pallas_src>

<mosaic_0001>
module attributes {stable_mosaic.version = 11 : i64} {
  func.func @_conv3x3_kernel(%arg0: i32, %arg1: memref<1x3x290xf32, #tpu.memory_space<vmem>>, %arg2: memref<64x27xf32, #tpu.memory_space<vmem>>, %arg3: memref<64x1xf32, #tpu.memory_space<vmem>>, %arg4: memref<1x64x256xf32, #tpu.memory_space<vmem>>, %arg5: memref<27x256xf32, #tpu.memory_space<vmem>>) attributes {dimension_semantics = [#tpu.dimension_semantics<parallel>], iteration_bounds = array<i64: 2>, scalar_prefetch = 0 : i64, scratch_operands = 1 : i64, tpu.core_type = #tpu.core_type<tc>, window_params = [{transform_indices = @transform_0, window_bounds = array<i64: 1, 3, 290>}, {pipeline_mode = #tpu.pipeline_mode<synchronous>, transform_indices = @transform_1, window_bounds = array<i64: 64, 27>}, {pipeline_mode = #tpu.pipeline_mode<synchronous>, transform_indices = @transform_2, window_bounds = array<i64: 64, 1>}, {transform_indices = @transform_3, window_bounds = array<i64: 1, 64, 256>}]} {
    %c0 = arith.constant 0 : index
    %c0_0 = arith.constant 0 : index
    %c0_1 = arith.constant 0 : index
    %0 = vector.load %arg1[%c0, %c0_0, %c0_1] : memref<1x3x290xf32, #tpu.memory_space<vmem>>, vector<1x3x256xf32>
    %1 = vector.shape_cast %0 : vector<1x3x256xf32> to vector<3x256xf32>
    %c0_2 = arith.constant 0 : index
    %c0_3 = arith.constant 0 : index
    %2 = vector.load %arg5[%c0_2, %c0_3] : memref<27x256xf32, #tpu.memory_space<vmem>>, vector<3x256xf32>
    tpu.vector_store %arg5[%c0_2, %c0_3], %1 {strides = array<i32>} : memref<27x256xf32, #tpu.memory_space<vmem>>, vector<3x256xf32>,
    %c0_4 = arith.constant 0 : index
    %c0_5 = arith.constant 0 : index
    %c1 = arith.constant 1 : index
    %3 = vector.load %arg1[%c0_4, %c0_5, %c1] : memref<1x3x290xf32, #tpu.memory_space<vmem>>, vector<1x3x256xf32>
    %4 = vector.shape_cast %3 : vector<1x3x256xf32> to vector<3x256xf32>
    %c3 = arith.constant 3 : index
    %c0_6 = arith.constant 0 : index
    %5 = vector.load %arg5[%c3, %c0_6] : memref<27x256xf32, #tpu.memory_space<vmem>>, vector<3x256xf32>
    tpu.vector_store %arg5[%c3, %c0_6], %4 {strides = array<i32>} : memref<27x256xf32, #tpu.memory_space<vmem>>, vector<3x256xf32>,
    %c0_7 = arith.constant 0 : index
    %c0_8 = arith.constant 0 : index
    %c2 = arith.constant 2 : index
    %6 = vector.load %arg1[%c0_7, %c0_8, %c2] : memref<1x3x290xf32, #tpu.memory_space<vmem>>, vector<1x3x256xf32>
    %7 = vector.shape_cast %6 : vector<1x3x256xf32> to vector<3x256xf32>
    %c6 = arith.constant 6 : index
    %c0_9 = arith.constant 0 : index
    %8 = vector.load %arg5[%c6, %c0_9] : memref<27x256xf32, #tpu.memory_space<vmem>>, vector<3x256xf32>
    tpu.vector_store %arg5[%c6, %c0_9], %7 {strides = array<i32>} : memref<27x256xf32, #tpu.memory_space<vmem>>, vector<3x256xf32>,
    %c0_10 = arith.constant 0 : index
    %c0_11 = arith.constant 0 : index
    %c16 = arith.constant 16 : index
    %9 = vector.load %arg1[%c0_10, %c0_11, %c16] : memref<1x3x290xf32, #tpu.memory_space<vmem>>, vector<1x3x256xf32>
    %10 = vector.shape_cast %9 : vector<1x3x256xf32> to vector<3x256xf32>
    %c9 = arith.constant 9 : index
    %c0_12 = arith.constant 0 : index
    %11 = vector.load %arg5[%c9, %c0_12] : memref<27x256xf32, #tpu.memory_space<vmem>>, vector<3x256xf32>
    tpu.vector_store %arg5[%c9, %c0_12], %10 {strides = array<i32>} : memref<27x256xf32, #tpu.memory_space<vmem>>, vector<3x256xf32>,
    %c0_13 = arith.constant 0 : index
    %c0_14 = arith.constant 0 : index
    %c17 = arith.constant 17 : index
    %12 = vector.load %arg1[%c0_13, %c0_14, %c17] : memref<1x3x290xf32, #tpu.memory_space<vmem>>, vector<1x3x256xf32>
    %13 = vector.shape_cast %12 : vector<1x3x256xf32> to vector<3x256xf32>
    %c12 = arith.constant 12 : index
    %c0_15 = arith.constant 0 : index
    %14 = vector.load %arg5[%c12, %c0_15] : memref<27x256xf32, #tpu.memory_space<vmem>>, vector<3x256xf32>
    tpu.vector_store %arg5[%c12, %c0_15], %13 {strides = array<i32>} : memref<27x256xf32, #tpu.memory_space<vmem>>, vector<3x256xf32>,
    %c0_16 = arith.constant 0 : index
    %c0_17 = arith.constant 0 : index
    %c18 = arith.constant 18 : index
    %15 = vector.load %arg1[%c0_16, %c0_17, %c18] : memref<1x3x290xf32, #tpu.memory_space<vmem>>, vector<1x3x256xf32>
    %16 = vector.shape_cast %15 : vector<1x3x256xf32> to vector<3x256xf32>
    %c15 = arith.constant 15 : index
    %c0_18 = arith.constant 0 : index
    %17 = vector.load %arg5[%c15, %c0_18] : memref<27x256xf32, #tpu.memory_space<vmem>>, vector<3x256xf32>
    tpu.vector_store %arg5[%c15, %c0_18], %16 {strides = array<i32>} : memref<27x256xf32, #tpu.memory_space<vmem>>, vector<3x256xf32>,
    %c0_19 = arith.constant 0 : index
    %c0_20 = arith.constant 0 : index
    %c32 = arith.constant 32 : index
    %18 = vector.load %arg1[%c0_19, %c0_20, %c32] : memref<1x3x290xf32, #tpu.memory_space<vmem>>, vector<1x3x256xf32>
    %19 = vector.shape_cast %18 : vector<1x3x256xf32> to vector<3x256xf32>
    %c18_21 = arith.constant 18 : index
    %c0_22 = arith.constant 0 : index
    %20 = vector.load %arg5[%c18_21, %c0_22] : memref<27x256xf32, #tpu.memory_space<vmem>>, vector<3x256xf32>
    tpu.vector_store %arg5[%c18_21, %c0_22], %19 {strides = array<i32>} : memref<27x256xf32, #tpu.memory_space<vmem>>, vector<3x256xf32>,
    %c0_23 = arith.constant 0 : index
    %c0_24 = arith.constant 0 : index
    %c33 = arith.constant 33 : index
    %21 = vector.load %arg1[%c0_23, %c0_24, %c33] : memref<1x3x290xf32, #tpu.memory_space<vmem>>, vector<1x3x256xf32>
    %22 = vector.shape_cast %21 : vector<1x3x256xf32> to vector<3x256xf32>
    %c21 = arith.constant 21 : index
    %c0_25 = arith.constant 0 : index
    %23 = vector.load %arg5[%c21, %c0_25] : memref<27x256xf32, #tpu.memory_space<vmem>>, vector<3x256xf32>
    tpu.vector_store %arg5[%c21, %c0_25], %22 {strides = array<i32>} : memref<27x256xf32, #tpu.memory_space<vmem>>, vector<3x256xf32>,
    %c0_26 = arith.constant 0 : index
    %c0_27 = arith.constant 0 : index
    %c34 = arith.constant 34 : index
    %24 = vector.load %arg1[%c0_26, %c0_27, %c34] : memref<1x3x290xf32, #tpu.memory_space<vmem>>, vector<1x3x256xf32>
    %25 = vector.shape_cast %24 : vector<1x3x256xf32> to vector<3x256xf32>
    %c24 = arith.constant 24 : index
    %c0_28 = arith.constant 0 : index
    %26 = vector.load %arg5[%c24, %c0_28] : memref<27x256xf32, #tpu.memory_space<vmem>>, vector<3x256xf32>
    tpu.vector_store %arg5[%c24, %c0_28], %25 {strides = array<i32>} : memref<27x256xf32, #tpu.memory_space<vmem>>, vector<3x256xf32>,
    %c0_29 = arith.constant 0 : index
    %c0_30 = arith.constant 0 : index
    %27 = vector.load %arg2[%c0_29, %c0_30] : memref<64x27xf32, #tpu.memory_space<vmem>>, vector<64x27xf32>
    %c0_31 = arith.constant 0 : index
    %c0_32 = arith.constant 0 : index
    %28 = vector.load %arg5[%c0_31, %c0_32] : memref<27x256xf32, #tpu.memory_space<vmem>>, vector<27x256xf32>
    %cst = arith.constant dense<0.000000e+00> : vector<64x256xf32>
    %29 = tpu.matmul %27, %28, %cst {dimension_numbers = #tpu.dot_dimension_numbers<[1], [0], [0], [1], [0, 0, 1, 1], [], []>} : vector<64x27xf32>, vector<27x256xf32>, vector<64x256xf32> -> vector<64x256xf32>
    %c0_33 = arith.constant 0 : index
    %c0_34 = arith.constant 0 : index
    %30 = vector.load %arg3[%c0_33, %c0_34] : memref<64x1xf32, #tpu.memory_space<vmem>>, vector<64x1xf32>
    %31 = vector.broadcast %30 : vector<64x1xf32> to vector<64x256xf32>
    %32 = arith.addf %29, %31 : vector<64x256xf32>
    %c0_35 = arith.constant 0 : index
    %c0_36 = arith.constant 0 : index
    %c0_37 = arith.constant 0 : index
    %33 = vector.load %arg4[%c0_35, %c0_36, %c0_37] : memref<1x64x256xf32, #tpu.memory_space<vmem>>, vector<1x64x256xf32>
    %34 = vector.shape_cast %33 : vector<1x64x256xf32> to vector<64x256xf32>
    %35 = vector.shape_cast %32 : vector<64x256xf32> to vector<1x64x256xf32>
    tpu.vector_store %arg4[%c0_35, %c0_36, %c0_37], %35 {strides = array<i32>} : memref<1x64x256xf32, #tpu.memory_space<vmem>>, vector<1x64x256xf32>,
    return
  }
  func.func @transform_0(%arg0: i32) -> (i32, i32, i32) {
    %c0_i32 = arith.constant 0 : i32
    %c0_i32_0 = arith.constant 0 : i32
    %c0_i32_1 = arith.constant 0 : i32
    return %arg0, %c0_i32, %c0_i32_0 : i32, i32, i32
  }
  func.func @transform_1(%arg0: i32) -> (i32, i32) {
    %c0_i32 = arith.constant 0 : i32
    %c0_i32_0 = arith.constant 0 : i32
    %c0_i32_1 = arith.constant 0 : i32
    return %c0_i32, %c0_i32_0 : i32, i32
  }
  func.func @transform_2(%arg0: i32) -> (i32, i32) {
    %c0_i32 = arith.constant 0 : i32
    %c0_i32_0 = arith.constant 0 : i32
    %c0_i32_1 = arith.constant 0 : i32
    return %c0_i32, %c0_i32_0 : i32, i32
  }
  func.func @transform_3(%arg0: i32) -> (i32, i32, i32) {
    %c0_i32 = arith.constant 0 : i32
    %c0_i32_0 = arith.constant 0 : i32
    %c0_i32_1 = arith.constant 0 : i32
    return %arg0, %c0_i32, %c0_i32_0 : i32, i32, i32
  }
}

</mosaic_0001>

<llo_original>
// kernel: conv2d_pallas.1
$region0: #{conv2d_pallas.1}
  #allocation0 [shape = 'u32[]', space=smem, size = 0x4, offset = 0x4, fixed_abs, tag = 'smem constant byte address 0x4 - core index']
  #allocation1 [shape = 'u32[144,128]{1,0:T(1,128)}', space=vmem, size = 0x12000, scoped, tag = 'internal scratch']
  #allocation2 [shape = 'f32[27,256]{1,0:T(8,128)}', space=vmem, size = 0x8000, scoped, tag = 'scratch operand']
  %s0 = inlined_call_operand.vmem [shape: f32[2,3,290], index: 0, kind: input, shape index: {}]
  %s1 = inlined_call_operand.vmem [shape: f32[64,27], index: 1, kind: input, shape index: {}]
  %s2 = inlined_call_operand.vmem [shape: f32[64,1], index: 2, kind: input, shape index: {}]
  %s3 = inlined_call_operand.vmem [shape: f32[2,64,256], index: 3, kind: output, shape index: {}]
  %s4 = sld [smem:[#allocation0]]
  $region45: #{conv2d_pallas.1} parent=0
    _
  %s6 = ssub.s32 1, %s4
  %s7 = scalar_select 0, %s6, %s4
  loop: start=0, step=1, limit=4
  $region2: #{conv2d_pallas.1} parent=0 // loop_pre_header
    _
  $region3: #{conv2d_pallas.1} parent=0 // loop_header
    %s9 = sphi 0, %s13
    %p10 = scmp.ge.s32.totalorder %s9, 4
    %s19 = sphi 0, %s21
    %s22 = sphi 0, %s19
    %s23 = sphi 0, %s22
    %s39 = sphi 0, %s23
    %s43 = sphi 0, %s43
    %s45 = sphi 0, %s43
    %s46 = sphi 0, %s45
    %s60 = sphi 0, %s46
    %s64 = sphi 0, %s64
    %s66 = sphi 0, %s64
    %s67 = sphi 0, %s66
    %s81 = sphi 0, %s67
    %s87 = sphi 0, %s89
    %s90 = sphi 0, %s87
    %s91 = sphi 0, %s90
    %s107 = sphi 0, %s91
  $region4: #{conv2d_pallas.1} parent=0 // loop_header_branch
    %12 = sbr.rel (%p10) target = $region8
  $region5: #{conv2d_pallas.1} parent=0 // loop_body
    %s14 = ssub.s32 %s9, 1
    %s15 = ssub.s32 %s9, 2
    %s16 = sadd.s32 %s9, 1
    %s17 = ssub.s32 %s9, %s16
    %p18 = scmp.eq.s32.totalorder %s17, 0
    %s20 = sadd.s32 %s19, 1
    %s21 = scalar_select %p18, %s19, %s20
    %p24 = pneg %p18
    %p25 = scmp.eq.s32.totalorder %s9, 1
    %p26 = por %p24, %p25
    %p27 = scmp.ne.s32.totalorder %s19, %s22
    %p28 = scmp.eq.s32.totalorder %s9, 0
    %p29 = por %p27, %p28
    %p30 = scmp.ne.s32.totalorder %s19, %s22
    %p31 = scmp.eq.s32.totalorder %s14, 1
    %p32 = por %p30, %p31
    %p33 = scmp.ne.s32.totalorder %s22, %s23
    %p34 = scmp.eq.s32.totalorder %s14, 0
    %p35 = por %p33, %p34
    %p36 = scmp.ne.s32.totalorder %s22, %s23
    %p37 = scmp.eq.s32.totalorder %s15, 1
    %p38 = por %p36, %p37
    %p40 = scmp.ne.s32.totalorder %s23, %s39
    %p41 = scmp.eq.s32.totalorder %s15, 0
    %p42 = por %p40, %p41
    %s44 = sadd.s32 %s43, 1
    %p47 = scmp.eq.s32.totalorder %s9, 1
    %p48 = scmp.ne.s32.totalorder %s43, %s45
    %p49 = scmp.eq.s32.totalorder %s9, 0
    %p50 = por %p48, %p49
    %p51 = scmp.ne.s32.totalorder %s43, %s45
    %p52 = scmp.eq.s32.totalorder %s14, 1
    %p53 = por %p51, %p52
    %p54 = scmp.ne.s32.totalorder %s45, %s46
    %p55 = scmp.eq.s32.totalorder %s14, 0
    %p56 = por %p54, %p55
    %p57 = scmp.ne.s32.totalorder %s45, %s46
    %p58 = scmp.eq.s32.totalorder %s15, 1
    %p59 = por %p57, %p58
    %p61 = scmp.ne.s32.totalorder %s46, %s60
    %p62 = scmp.eq.s32.totalorder %s15, 0
    %p63 = por %p61, %p62
    %s65 = sadd.s32 %s64, 1
    %p68 = scmp.eq.s32.totalorder %s9, 1
    %p69 = scmp.ne.s32.totalorder %s64, %s66
    %p70 = scmp.eq.s32.totalorder %s9, 0
    %p71 = por %p69, %p70
    %p72 = scmp.ne.s32.totalorder %s64, %s66
    %p73 = scmp.eq.s32.totalorder %s14, 1
    %p74 = por %p72, %p73
    %p75 = scmp.ne.s32.totalorder %s66, %s67
    %p76 = scmp.eq.s32.totalorder %s14, 0
    %p77 = por %p75, %p76
    %p78 = scmp.ne.s32.totalorder %s66, %s67
    %p79 = scmp.eq.s32.totalorder %s15, 1
    %p80 = por %p78, %p79
    %p82 = scmp.ne.s32.totalorder %s67, %s81
    %p83 = scmp.eq.s32.totalorder %s15, 0
    %p84 = por %p82, %p83
    %s85 = ssub.s32 %s9, %s16
    %p86 = scmp.eq.s32.totalorder %s85, 0
    %s88 = sadd.s32 %s87, 1
    %s89 = scalar_select %p86, %s87, %s88
    %p92 = pneg %p86
    %p93 = scmp.eq.s32.totalorder %s9, 1
    %p94 = por %p92, %p93
    %p95 = scmp.ne.s32.totalorder %s87, %s90
    %p96 = scmp.eq.s32.totalorder %s9, 0
    %p97 = por %p95, %p96
    %p98 = scmp.ne.s32.totalorder %s87, %s90
    %p99 = scmp.eq.s32.totalorder %s14, 1
    %p100 = por %p98, %p99
    %p101 = scmp.ne.s32.totalorder %s90, %s91
    %p102 = scmp.eq.s32.totalorder %s14, 0
    %p103 = por %p101, %p102
    %p104 = scmp.ne.s32.totalorder %s90, %s91
    %p105 = scmp.eq.s32.totalorder %s15, 1
    %p106 = por %p104, %p105
    %p108 = scmp.ne.s32.totalorder %s91, %s107
    %p109 = scmp.eq.s32.totalorder %s15, 0
    %p110 = por %p108, %p109
    %p111 = scmp.le.s32.totalorder 1, %s9
    %p112 = scmp.lt.s32.totalorder %s9, 3
    %p113 = pnand %p111, %p112
    %p114 = pneg %p113
    // Predicated region
    $region9: #{conv2d_pallas.1} parent=5 // pred_check
      _
    $region10: #{conv2d_pallas.1} parent=5 // pred_check_branch
      %116 = sbr.rel (%p113) target = $region12
    $region11: #{conv2d_pallas.1} parent=5 // pred_region
      %s117 = ssub.s32 %s9, 1
      // Predicated region
      $region13: #{conv2d_pallas.1} parent=11 // pred_check
        %p118 = pneg %p56
      $region14: #{conv2d_pallas.1} parent=11 // pred_check_branch
        %120 = sbr.rel (%p118) target = $region16
      $region15: #{conv2d_pallas.1} parent=11 // pred_region
        _
      $region16: #{conv2d_pallas.1} parent=11 // pred_fallthru
        _
      // Predicated region
      $region17: #{conv2d_pallas.1} parent=11 // pred_check
        %p121 = pneg %p77
      $region18: #{conv2d_pallas.1} parent=11 // pred_check_branch
        %123 = sbr.rel (%p121) target = $region20
      $region19: #{conv2d_pallas.1} parent=11 // pred_region
        _
      $region20: #{conv2d_pallas.1} parent=11 // pred_fallthru
        _
    $region12: #{conv2d_pallas.1} parent=5 // pred_fallthru
      _
    %p124 = scmp.lt.s32.totalorder %s9, 2
    // Predicated region
    $region21: #{conv2d_pallas.1} parent=5 // pred_check
      %p125 = pneg %p124
    $region22: #{conv2d_pallas.1} parent=5 // pred_check_branch
      %127 = sbr.rel (%p125) target = $region24
    $region23: #{conv2d_pallas.1} parent=5 // pred_region
      // Predicated region
      $region25: #{conv2d_pallas.1} parent=23 // pred_check
        %p128 = pneg %p29
      $region26: #{conv2d_pallas.1} parent=23 // pred_check_branch
        %130 = sbr.rel (%p128) target = $region28
      $region27: #{conv2d_pallas.1} parent=23 // pred_region
        %p131 = scmp.lt.s32.totalorder %s9, 1
        %s132 = scalar_select %p131, %s9, 1
        %s133 = smul.addr %s132, 3
        %s134 = smul.addr %s133, 4
        %s135 = scalar_lea.vmem %s0, %s134
      $region28: #{conv2d_pallas.1} parent=23 // pred_fallthru
        _
    $region24: #{conv2d_pallas.1} parent=5 // pred_fallthru
      _
    %p136 = scmp.le.s32.totalorder 1, %s9
    %p137 = scmp.lt.s32.totalorder %s9, 3
    %p138 = pnand %p136, %p137
    %p139 = pneg %p138
    // Predicated region
    $region29: #{conv2d_pallas.1} parent=5 // pred_check
      _
    $region30: #{conv2d_pallas.1} parent=5 // pred_check_branch
      %141 = sbr.rel (%p138) target = $region32
    $region31: #{conv2d_pallas.1} parent=5 // pred_region
      %s142 = ssub.s32 %s9, 1
      %p143 = scmp.lt.s32.totalorder %s14, 1
      %s144 = scalar_select %p143, %s14, 1
      %s145 = smul.addr %s144, 3
      %s146 = smul.addr %s145, 4
      %s147 = scalar_lea.vmem %s0, %s146
      %p148 = pneg %p35
      %p149 = pneg %p32
      %p150 = pneg %p56
      %p151 = pneg %p53
      %p152 = pneg %p77
      %p153 = pneg %p74
      %p154 = pneg %p103
      %p155 = pneg %p100
      %p156 = scmp.lt.s32.totalorder %s14, 1
      %s157 = scalar_select %p156, %s14, 1
      %s158 = smul.addr %s157, 16
      %s159 = smul.addr %s158, 8
      %s160 = scalar_lea.vmem %s3, %s159
      %p161 = scmp.lt.s32.totalorder %s14, 1
      %s162 = scalar_select %p161, %s14, 1
      %s163 = smul.addr %s162, 3
      %s164 = smul.addr %s163, 4
      %s165 = scalar_lea.vmem %s0, %s164
      %p166 = scmp.lt.s32.totalorder %s14, 1
      %s167 = scalar_select %p166, %s14, 1
      %s168 = smul.addr %s167, 16
      %s169 = smul.addr %s168, 8
      %s170 = scalar_lea.vmem %s3, %s169
      %v171 = vld [vmem:[%s165] sm:$0x77]
      %v173 = vcombine.high %v171, %v171
      %175 = vst [vmem:[#allocation2] sm:$0x7] %v171
      %176 = vst [vmem:[#allocation2 + $0x8] sm:$0x7] %v173
      %v177 = vld [vmem:[%s165] sm:$0x77]
      %v178 = vld [vmem:[%s165 + $0x8] sm:$0x7]
      %v181 = vcombine.high %v177, %v177
      %v182 = vrot.slane %v177, 5
      %v183 = vrot.slane %v181, 5
      %v184 = vrot.slane %v178, 5
      %185 = vrot.lane.b32.xlu0 %v182, 127
      %v186 = vpop.permute.xlu0 %185
      %187 = vrot.lane.b32.xlu0 %v183, 127
      %v188 = vpop.permute.xlu0 %187
      %189 = vrot.lane.b32.xlu0 %v184, 127
      %v190 = vpop.permute.xlu0 %189
      %vm191 = vcmask 1039360
      %v192 = vsel %vm191, %v186, %v188
      %v193 = vsel %vm191, %v188, %v190
      %196 = vst [vmem:[#allocation2] sm:$0x38] %v192
      %197 = vst [vmem:[#allocation2 + $0x8] sm:$0x38] %v193
      %v198 = vld [vmem:[%s165] sm:$0x77]
      %v199 = vld [vmem:[%s165 + $0x8] sm:$0x7]
      %v202 = vcombine.high %v198, %v198
      %v203 = vrot.slane %v198, 2
      %v204 = vrot.slane %v202, 2
      %v205 = vrot.slane %v199, 2
      %206 = vrot.lane.b32.xlu0 %v203, 126
      %v207 = vpop.permute.xlu0 %206
      %208 = vrot.lane.b32.xlu0 %v204, 126
      %v209 = vpop.permute.xlu0 %208
      %210 = vrot.lane.b32.xlu0 %v205, 126
      %v211 = vpop.permute.xlu0 %210
      %vm212 = vcmask 1031168
      %v213 = vsel %vm212, %v207, %v209
      %v214 = vsel %vm212, %v209, %v211
      %217 = vst [vmem:[#allocation2] sm:$0xc0] %v213
      %218 = vst [vmem:[#allocation2 + $0x8] sm:$0xc0] %v214
      %219 = vst [vmem:[#allocation2 + $0x10] sm:$0x1] %v213
      %220 = vst [vmem:[#allocation2 + $0x18] sm:$0x1] %v214
      %v221 = vld [vmem:[%s165] sm:$0x77]
      %v222 = vld [vmem:[%s165 + $0x8] sm:$0x7]
      %v225 = vcombine.high %v221, %v221
      %v226 = vrot.slane %v221, 7
      %v227 = vrot.slane %v225, 7
      %v228 = vrot.slane %v222, 7
      %229 = vrot.lane.b32.xlu0 %v226, 112
      %v230 = vpop.permute.xlu0 %229
      %231 = vrot.lane.b32.xlu0 %v227, 112
      %v232 = vpop.permute.xlu0 %231
      %233 = vrot.lane.b32.xlu0 %v228, 112
      %v234 = vpop.permute.xlu0 %233
      %vm235 = vcmask 916480
      %v236 = vsel %vm235, %v230, %v232
      %v237 = vsel %vm235, %v232, %v234
      %240 = vst [vmem:[#allocation2 + $0x10] sm:$0xe] %v236
      %241 = vst [vmem:[#allocation2 + $0x18] sm:$0xe] %v237
      %v242 = vld [vmem:[%s165] sm:$0x77]
      %v243 = vld [vmem:[%s165 + $0x8] sm:$0x7]
      %v246 = vcombine.low %v242, %v242
      %v247 = vcombine.low %v243, %v243
      %248 = vrot.lane.b32.xlu0 %v246, 111
      %v249 = vpop.permute.xlu0 %248
      %250 = vrot.lane.b32.xlu0 %v242, 111
      %v251 = vpop.permute.xlu0 %250
      %252 = vrot.lane.b32.xlu0 %v247, 111
      %v253 = vpop.permute.xlu0 %252
      %vm254 = vcmask 908288
      %v255 = vsel %vm254, %v249, %v251
      %v256 = vsel %vm254, %v251, %v253
      %259 = vst [vmem:[#allocation2 + $0x10] sm:$0x70] %v255
      %260 = vst [vmem:[#allocation2 + $0x18] sm:$0x70] %v256
      %v261 = vld [vmem:[%s165] sm:$0x77]
      %v262 = vld [vmem:[%s165 + $0x8] sm:$0x7]
      %v265 = vcombine.high %v261, %v261
      %v266 = vrot.slane %v261, 1
      %v267 = vrot.slane %v265, 1
      %v268 = vrot.slane %v262, 1
      %269 = vrot.lane.b32.xlu0 %v266, 110
      %v270 = vpop.permute.xlu0 %269
      %271 = vrot.lane.b32.xlu0 %v267, 110
      %v272 = vpop.permute.xlu0 %271
      %273 = vrot.lane.b32.xlu0 %v268, 110
      %v274 = vpop.permute.xlu0 %273
      %vm275 = vcmask 900096
      %v276 = vsel %vm275, %v270, %v272
      %v277 = vsel %vm275, %v272, %v274
      %280 = vst [vmem:[#allocation2 + $0x10] sm:$0x80] %v276
      %281 = vst [vmem:[#allocation2 + $0x18] sm:$0x80] %v277
      %282 = vst [vmem:[#allocation2 + $0x20] sm:$0x3] %v276
      %283 = vst [vmem:[#allocation2 + $0x28] sm:$0x3] %v277
      %v284 = vld [vmem:[%s165] sm:$0x77]
      %v285 = vld [vmem:[%s165 + $0x8] sm:$0x7]
      %v288 = vcombine.high %v284, %v284
      %v289 = vrot.slane %v284, 6
      %v290 = vrot.slane %v288, 6
      %v291 = vrot.slane %v285, 6
      %292 = vrot.lane.b32.xlu0 %v289, 96
      %v293 = vpop.permute.xlu0 %292
      %294 = vrot.lane.b32.xlu0 %v290, 96
      %v295 = vpop.permute.xlu0 %294
      %296 = vrot.lane.b32.xlu0 %v291, 96
      %v297 = vpop.permute.xlu0 %296
      %vm298 = vcmask 785408
      %v299 = vsel %vm298, %v293, %v295
      %v300 = vsel %vm298, %v295, %v297
      %303 = vst [vmem:[#allocation2 + $0x20] sm:$0x1c] %v299
      %304 = vst [vmem:[#allocation2 + $0x28] sm:$0x1c] %v300
      %v305 = vld [vmem:[%s165] sm:$0x77]
      %v306 = vld [vmem:[%s165 + $0x8] sm:$0x7]
      %v309 = vcombine.high %v305, %v305
      %v310 = vrot.slane %v305, 3
      %v311 = vrot.slane %v309, 3
      %v312 = vrot.slane %v306, 3
      %313 = vrot.lane.b32.xlu0 %v310, 95
      %v314 = vpop.permute.xlu0 %313
      %315 = vrot.lane.b32.xlu0 %v311, 95
      %v316 = vpop.permute.xlu0 %315
      %317 = vrot.lane.b32.xlu0 %v312, 95
      %v318 = vpop.permute.xlu0 %317
      %vm319 = vcmask 777216
      %v320 = vsel %vm319, %v314, %v316
      %v321 = vsel %vm319, %v316, %v318
      %324 = vst [vmem:[#allocation2 + $0x20] sm:$0xe0] %v320
      %325 = vst [vmem:[#allocation2 + $0x28] sm:$0xe0] %v321
      %v326 = vld [vmem:[%s165] sm:$0x77]
      %v327 = vld [vmem:[%s165 + $0x8] sm:$0x7]
      %v330 = vcombine.high %v326, %v326
      %331 = vrot.lane.b32.xlu0 %v326, 94
      %v332 = vpop.permute.xlu0 %331
      %333 = vrot.lane.b32.xlu0 %v330, 94
      %v334 = vpop.permute.xlu0 %333
      %335 = vrot.lane.b32.xlu0 %v327, 94
      %v336 = vpop.permute.xlu0 %335
      %vm337 = vcmask 769024
      %v338 = vsel %vm337, %v332, %v334
      %v339 = vsel %vm337, %v334, %v336
      %342 = vst [vmem:[#allocation2 + $0x30] sm:$0x7] %v338
      %343 = vst [vmem:[#allocation2 + $0x38] sm:$0x7] %v339
      %v344 = vld [vmem:[%s1] sm:$0xff]
      %v345 = vld [vmem:[%s1 + $0x8] sm:$0xff]
      %v346 = vld [vmem:[%s1 + $0x10] sm:$0xff]
      %v347 = vld [vmem:[%s1 + $0x18] sm:$0xff]
      %v348 = vld [vmem:[%s1 + $0x20] sm:$0xff]
      %v349 = vld [vmem:[%s1 + $0x28] sm:$0xff]
      %v350 = vld [vmem:[%s1 + $0x30] sm:$0xff]
      %v351 = vld [vmem:[%s1 + $0x38] sm:$0xff]
      %v352 = vld [vmem:[#allocation2] sm:$0xff]
      %v353 = vld [vmem:[#allocation2 + $0x8] sm:$0xff]
      %v354 = vld [vmem:[#allocation2 + $0x10] sm:$0xff]
      %v355 = vld [vmem:[#allocation2 + $0x18] sm:$0xff]
      %v356 = vld [vmem:[#allocation2 + $0x20] sm:$0xff]
      %v357 = vld [vmem:[#allocation2 + $0x28] sm:$0xff]
      %v358 = vld [vmem:[#allocation2 + $0x30] sm:$0x7]
      %v359 = vld [vmem:[#allocation2 + $0x38] sm:$0x7]
      %v360 = vld [vmem:[%s2] sm:$0xff]
      %v361 = vld [vmem:[%s2 + $0x8] sm:$0xff]
      %v362 = vld [vmem:[%s2 + $0x10] sm:$0xff]
      %v363 = vld [vmem:[%s2 + $0x18] sm:$0xff]
      %v364 = vld [vmem:[%s2 + $0x20] sm:$0xff]
      %v365 = vld [vmem:[%s2 + $0x28] sm:$0xff]
      %v366 = vld [vmem:[%s2 + $0x30] sm:$0xff]
      %v367 = vld [vmem:[%s2 + $0x38] sm:$0xff]
      %369 = vset.pattern.permute.xlu0 0
      %370 = vperm.xlu0 %369, %v360
      %v371 = vpop.permute.xlu0 %370
      %374 = vset.pattern.permute.xlu0 0
      %375 = vperm.xlu0 %374, %v361
      %v376 = vpop.permute.xlu0 %375
      %379 = vset.pattern.permute.xlu0 0
      %380 = vperm.xlu0 %379, %v362
      %v381 = vpop.permute.xlu0 %380
      %384 = vset.pattern.permute.xlu0 0
      %385 = vperm.xlu0 %384, %v363
      %v386 = vpop.permute.xlu0 %385
      %389 = vset.pattern.permute.xlu0 0
      %390 = vperm.xlu0 %389, %v364
      %v391 = vpop.permute.xlu0 %390
      %394 = vset.pattern.permute.xlu0 0
      %395 = vperm.xlu0 %394, %v365
      %v396 = vpop.permute.xlu0 %395
      %399 = vset.pattern.permute.xlu0 0
      %400 = vperm.xlu0 %399, %v366
      %v401 = vpop.permute.xlu0 %400
      %404 = vset.pattern.permute.xlu0 0
      %405 = vperm.xlu0 %404, %v367
      %v406 = vpop.permute.xlu0 %405
      %vm408 = vcmask 220160
      %v410 = vsel %vm408, %v344, 0
      %v413 = vsel %vm408, %v345, 0
      %v416 = vsel %vm408, %v346, 0
      %v419 = vsel %vm408, %v347, 0
      %v422 = vsel %vm408, %v348, 0
      %v425 = vsel %vm408, %v349, 0
      %v428 = vsel %vm408, %v350, 0
      %v431 = vsel %vm408, %v351, 0
      %vm433 = vcmask 1042432
      %v435 = vsel %vm433, %v358, 0
      %v438 = vsel %vm433, %v359, 0
      %440 = vmatprep.subr.mxu0 %v353
      %441 = vmatpush1.msra.mxu0 %v352
      %442 = vmatprep.subr.mxu0 %v355
      %443 = vmatpush1.msra.mxu0 %v354
      %444 = vmatprep.subr.mxu0 %v357
      %445 = vmatpush1.msra.mxu0 %v356
      %446 = vmatprep.subr.mxu0 %v438
      %447 = vmatpush1.msra.mxu0 %v435
      %448 = vmatprep.subr.mxu0 0.0
      %449 = vmatpush1.msra.mxu0 0.0
      %450 = vmatprep.subr.mxu0 0.0
      %451 = vmatpush1.msra.mxu0 0.0
      %452 = vmatprep.subr.mxu0 0.0
      %453 = vmatpush1.msra.mxu0 0.0
      %454 = vmatprep.subr.mxu0 0.0
      %455 = vmatpush1.msra.mxu0 0.0
      %456 = vmatprep.subr.mxu0 0.0
      %457 = vmatpush1.msra.mxu0 0.0
      %458 = vmatprep.subr.mxu0 0.0
      %459 = vmatpush1.msra.mxu0 0.0
      %460 = vmatprep.subr.mxu0 0.0
      %461 = vmatpush1.msra.mxu0 0.0
      %462 = vmatprep.subr.mxu0 0.0
      %463 = vmatpush1.msra.mxu0 0.0
      %464 = vmatprep.subr.mxu0 0.0
      %465 = vmatpush1.msra.mxu0 0.0
      %466 = vmatprep.subr.mxu0 0.0
      %467 = vmatpush1.msra.mxu0 0.0
      %468 = vmatprep.subr.mxu0 0.0
      %469 = vmatpush1.msra.mxu0 0.0
      %470 = vmatprep.subr.mxu0 0.0
      %471 = vmatpush1.msra.mxu0 0.0
      %472 = vmatprep.subr.mxu0 0.0
      %473 = vmatpush1.msra.mxu0 0.0
      %474 = vmatprep.subr.mxu0 0.0
      %475 = vmatpush1.msra.mxu0 0.0
      %476 = vmatprep.subr.mxu0 0.0
      %477 = vmatpush1.msra.mxu0 0.0
      %478 = vmatprep.subr.mxu0 0.0
      %479 = vmatpush1.msra.mxu0 0.0
      %480 = vmatprep.subr.mxu0 0.0
      %481 = vmatpush1.msra.mxu0 0.0
      %482 = vmatprep.subr.mxu0 0.0
      %483 = vmatpush1.msra.mxu0 0.0
      %484 = vmatprep.subr.mxu0 0.0
      %485 = vmatpush1.msra.mxu0 0.0
      %486 = vmatprep.subr.mxu0 0.0
      %487 = vmatpush1.msra.mxu0 0.0
      %488 = vmatprep.subr.mxu0 0.0
      %489 = vmatpush1.msra.mxu0 0.0
      %490 = vmatprep.subr.mxu0 0.0
      %491 = vmatpush1.msra.mxu0 0.0
      %492 = vmatprep.subr.mxu0 0.0
      %493 = vmatpush1.msra.mxu0 0.0
      %494 = vmatprep.subr.mxu0 0.0
      %495 = vmatpush1.msra.mxu0 0.0
      %496 = vmatprep.subr.mxu0 0.0
      %497 = vmatpush1.msra.mxu0 0.0
      %498 = vmatprep.subr.mxu0 0.0
      %499 = vmatpush1.msra.mxu0 0.0
      %500 = vmatprep.subr.mxu0 0.0
      %501 = vmatpush1.msra.mxu0 0.0
      %502 = vmatprep.subr.mxu0 0.0
      %503 = vmatpush1.msra.mxu0 0.0
      %504 = vmatprep.mubr.f32.mxu0 0.0
      %505 = vmatmul.mubr.f32.gmra.mrb[0].mxu0 %v410
      %v506 = vpop.f32.mrb[0].mxu0
      %v507 = vadd.f32 %v371, %v506
      %v508 = vpop.f32.mrb[0].mxu0
      %v509 = vadd.f32 %v371, %v508
      %510 = vmatprep.mubr.f32.mxu0 0.0
      %511 = vmatmul.mubr.f32.gmra.mrb[0].mxu0 %v413
      %v512 = vpop.f32.mrb[0].mxu0
      %v513 = vadd.f32 %v376, %v512
      %v514 = vpop.f32.mrb[0].mxu0
      %v515 = vadd.f32 %v376, %v514
      %516 = vmatprep.mubr.f32.mxu0 0.0
      %517 = vmatmul.mubr.f32.gmra.mrb[0].mxu0 %v416
      %v518 = vpop.f32.mrb[0].mxu0
      %v519 = vadd.f32 %v381, %v518
      %v520 = vpop.f32.mrb[0].mxu0
      %v521 = vadd.f32 %v381, %v520
      %522 = vmatprep.mubr.f32.mxu0 0.0
      %523 = vmatmul.mubr.f32.gmra.mrb[0].mxu0 %v419
      %v524 = vpop.f32.mrb[0].mxu0
      %v525 = vadd.f32 %v386, %v524
      %v526 = vpop.f32.mrb[0].mxu0
      %v527 = vadd.f32 %v386, %v526
      %528 = vmatprep.mubr.f32.mxu0 0.0
      %529 = vmatmul.mubr.f32.gmra.mrb[0].mxu0 %v422
      %v530 = vpop.f32.mrb[0].mxu0
      %v531 = vadd.f32 %v391, %v530
      %v532 = vpop.f32.mrb[0].mxu0
      %v533 = vadd.f32 %v391, %v532
      %534 = vmatprep.mubr.f32.mxu0 0.0
      %535 = vmatmul.mubr.f32.gmra.mrb[0].mxu0 %v425
      %v536 = vpop.f32.mrb[0].mxu0
      %v537 = vadd.f32 %v396, %v536
      %v538 = vpop.f32.mrb[0].mxu0
      %v539 = vadd.f32 %v396, %v538
      %540 = vmatprep.mubr.f32.mxu0 0.0
      %541 = vmatmul.mubr.f32.gmra.mrb[0].mxu0 %v428
      %v542 = vpop.f32.mrb[0].mxu0
      %v543 = vadd.f32 %v401, %v542
      %v544 = vpop.f32.mrb[0].mxu0
      %v545 = vadd.f32 %v401, %v544
      %546 = vmatprep.mubr.f32.mxu0 0.0
      %547 = vmatmul.mubr.f32.gmra.mrb[0].mxu0 %v431
      %v548 = vpop.f32.mrb[0].mxu0
      %v549 = vadd.f32 %v406, %v548
      %v550 = vpop.f32.mrb[0].mxu0
      %v551 = vadd.f32 %v406, %v550
      %552 = vdwg.mxu0
      %553 = vst [vmem:[%s170] sm:$0xff] %v507
      %554 = vst [vmem:[%s170 + $0x8] sm:$0xff] %v509
      %555 = vst [vmem:[%s170 + $0x10] sm:$0xff] %v513
      %556 = vst [vmem:[%s170 + $0x18] sm:$0xff] %v515
      %557 = vst [vmem:[%s170 + $0x20] sm:$0xff] %v519
      %558 = vst [vmem:[%s170 + $0x28] sm:$0xff] %v521
      %559 = vst [vmem:[%s170 + $0x30] sm:$0xff] %v525
      %560 = vst [vmem:[%s170 + $0x38] sm:$0xff] %v527
      %561 = vst [vmem:[%s170 + $0x40] sm:$0xff] %v531
      %562 = vst [vmem:[%s170 + $0x48] sm:$0xff] %v533
      %563 = vst [vmem:[%s170 + $0x50] sm:$0xff] %v537
      %564 = vst [vmem:[%s170 + $0x58] sm:$0xff] %v539
      %565 = vst [vmem:[%s170 + $0x60] sm:$0xff] %v543
      %566 = vst [vmem:[%s170 + $0x68] sm:$0xff] %v545
      %567 = vst [vmem:[%s170 + $0x70] sm:$0xff] %v549
      %568 = vst [vmem:[%s170 + $0x78] sm:$0xff] %v551
      %p569 = scmp.lt.s32.totalorder %s14, 1
      %s570 = scalar_select %p569, %s14, 1
      %s571 = smul.addr %s570, 16
      %s572 = smul.addr %s571, 8
      %s573 = scalar_lea.vmem %s3, %s572
      // Predicated region
      $region33: #{conv2d_pallas.1} parent=31 // pred_check
        %p574 = pneg %p100
      $region34: #{conv2d_pallas.1} parent=31 // pred_check_branch
        %576 = sbr.rel (%p574) target = $region36
      $region35: #{conv2d_pallas.1} parent=31 // pred_region
        _
      $region36: #{conv2d_pallas.1} parent=31 // pred_fallthru
        _
    $region32: #{conv2d_pallas.1} parent=5 // pred_fallthru
      _
    %p577 = scmp.le.s32.totalorder 2, %s9
    // Predicated region
    $region37: #{conv2d_pallas.1} parent=5 // pred_check
      %p578 = pneg %p577
    $region38: #{conv2d_pallas.1} parent=5 // pred_check_branch
      %580 = sbr.rel (%p578) target = $region40
    $region39: #{conv2d_pallas.1} parent=5 // pred_region
      %s581 = ssub.s32 %s9, 2
      // Predicated region
      $region41: #{conv2d_pallas.1} parent=39 // pred_check
        %p582 = pneg %p106
      $region42: #{conv2d_pallas.1} parent=39 // pred_check_branch
        %584 = sbr.rel (%p582) target = $region44
      $region43: #{conv2d_pallas.1} parent=39 // pred_region
        %p585 = scmp.lt.s32.totalorder %s15, 1
        %s586 = scalar_select %p585, %s15, 1
        %s587 = smul.addr %s586, 16
        %s588 = smul.addr %s587, 8
        %s589 = scalar_lea.vmem %s3, %s588
      $region44: #{conv2d_pallas.1} parent=39 // pred_fallthru
        _
    $region40: #{conv2d_pallas.1} parent=5 // pred_fallthru
      _
  $region6: #{conv2d_pallas.1} parent=0 // loop_footer
    %s13 = sadd.s32 1, %s9
  $region7: #{conv2d_pallas.1} parent=0 // loop_footer_branch
    %8 = sbr.rel target = $region3
  $region8: #{conv2d_pallas.1} parent=0 // loop_exit
    _

</llo_original>
